<compile_context>
chip_gen: v5e
topology: v5e:2x2
jax: 0.10.0
libtpu: 0.0.40
codegen_flags: <defaults>
</compile_context>

<pallas_src>
import functools

import jax
import jax.numpy as jnp
from jax import lax
from jax.experimental import pallas as pl
from jax.experimental.pallas import tpu as pltpu


def _self_attention_kernel(xq_ref, xkv_ref, wq_ref, bq_ref, wkv_ref, bkv_ref,
                           wo_ref, bo_ref, o_ref, *, num_heads, head_dim,
                           embed_dim):
    """One (batch, query-tile) grid step.

    xq_ref  : (Tq, E)  bf16  query rows of this tile (batch b)
    xkv_ref : (S,  E)  bf16  full sequence of batch b (K/V source)
    wq_ref  : (E,  E)  bf16  q_proj weight, pre-transposed, 1/sqrt(hd) folded in
    bq_ref  : (1,  E)  f32   q_proj bias * 1/sqrt(hd)
    wkv_ref : (E, 2E)  bf16  [k_proj | v_proj] weights, pre-transposed & fused
    bkv_ref : (1, 2E)  f32
    wo_ref  : (E,  E)  bf16  out_proj weight, pre-transposed
    bo_ref  : (1,  E)  f32
    o_ref   : (Tq, E)  f32
    """
    f32 = jnp.float32
    bf16 = jnp.bfloat16

    xq = xq_ref[...]
    xkv = xkv_ref[...]

    # Lane-dense projections on the MXU (bf16 in, f32 accumulate).
    q = jnp.dot(xq, wq_ref[...], preferred_element_type=f32) + bq_ref[...]
    kv = jnp.dot(xkv, wkv_ref[...], preferred_element_type=f32) + bkv_ref[...]

    qb = q.astype(bf16)
    kb = kv[:, :embed_dim].astype(bf16)
    vb = kv[:, embed_dim:].astype(bf16)

    # Per-head attention core (contraction dim = head_dim is inherent to MHA).
    head_outs = []
    for h in range(num_heads):                      # static unroll
        lo = h * head_dim
        qh = qb[:, lo:lo + head_dim]                # (Tq, hd)
        kh = kb[:, lo:lo + head_dim]                # (S,  hd)
        vh = vb[:, lo:lo + head_dim]                # (S,  hd)

        # scores: contract dim 1 of q with dim 1 of k — no explicit transpose.
        s = lax.dot_general(qh, kh, (((1,), (1,)), ((), ())),
                            preferred_element_type=f32)          # (Tq, S)
        s = s - jnp.max(s, axis=-1, keepdims=True)
        p = jnp.exp(s)
        p = p * pl.reciprocal(jnp.sum(p, axis=-1, keepdims=True), approx=True)

        head_outs.append(
            jnp.dot(p.astype(bf16), vh, preferred_element_type=f32))  # (Tq, hd)

    attn = jnp.concatenate(head_outs, axis=1).astype(bf16)            # (Tq, E)

    # Single lane-dense out-projection GEMM over the fused head outputs.
    o_ref[...] = (jnp.dot(attn, wo_ref[...], preferred_element_type=f32)
                  + bo_ref[...])

    # TODO(synk): attn_mask / key_padding_mask / incremental KV-cache / dropout
    # branches of the PyTorch forward are not exercised here.


def attention_forward(query, params, num_heads, *, block_q=128):
    """query: (tgt_len, bsz, embed_dim) float32 (Time x Batch x Channel).

    Returns (tgt_len, bsz, embed_dim) float32, matching the PyTorch
    Attention.forward default path (self-attention, no masks, eval mode).
    """
    T, B, E = query.shape
    hd = E // num_heads
    assert hd * num_heads == E, "embed_dim must be divisible by num_heads"
    assert E % 128 == 0, "embed_dim must be a multiple of 128 (TPU lane tile)"

    tq = block_q if (block_q <= T and T % block_q == 0 and block_q % 8 == 0) else T
    n_q = T // tq
    scaling = float(hd) ** (-0.5)

    bf16, f32 = jnp.bfloat16, jnp.float32

    # One-time host-side weight prep: transpose, fuse K|V, fold the q-scaling.
    wq_t = (params["q_w"] * scaling).T.astype(bf16)                    # (E, E)
    bq = (params["q_b"] * scaling).reshape(1, E).astype(f32)
    wkv_t = jnp.concatenate([params["k_w"].T, params["v_w"].T],
                            axis=1).astype(bf16)                       # (E, 2E)
    bkv = jnp.concatenate([params["k_b"], params["v_b"]]
                          ).reshape(1, 2 * E).astype(f32)
    wo_t = params["o_w"].T.astype(bf16)                                # (E, E)
    bo = params["o_b"].reshape(1, E).astype(f32)

    # View the time-major activation as (T, B*E): a free reshape (contiguous),
    # so there is no HBM-round-trip transpose.  Batch b = lane block b (width E).
    x_flat = query.reshape(T, B * E).astype(bf16)

    kernel = functools.partial(_self_attention_kernel, num_heads=num_heads,
                               head_dim=hd, embed_dim=E)

    out_flat = pl.pallas_call(
        kernel,
        out_shape=jax.ShapeDtypeStruct((T, B * E), f32),
        grid_spec=pltpu.PrefetchScalarGridSpec(
            num_scalar_prefetch=0,
            grid=(B, n_q),
            in_specs=[
                pl.BlockSpec((tq, E), lambda b, t: (t, b)),      # query rows
                pl.BlockSpec((T, E), lambda b, t: (0, b)),       # full seq (K/V)
                pl.BlockSpec((E, E), lambda b, t: (0, 0)),       # Wq  (resident)
                pl.BlockSpec((1, E), lambda b, t: (0, 0)),       # bq
                pl.BlockSpec((E, 2 * E), lambda b, t: (0, 0)),   # Wk|Wv (resident)
                pl.BlockSpec((1, 2 * E), lambda b, t: (0, 0)),   # bk|bv
                pl.BlockSpec((E, E), lambda b, t: (0, 0)),       # Wo  (resident)
                pl.BlockSpec((1, E), lambda b, t: (0, 0)),       # bo
            ],
            out_specs=pl.BlockSpec((tq, E), lambda b, t: (t, b)),
        ),
        compiler_params=pltpu.CompilerParams(
            dimension_semantics=("parallel", "parallel"),
            vmem_limit_bytes=48 * 1024 * 1024,
        ),
    )(x_flat, x_flat, wq_t, bq, wkv_t, bkv, wo_t, bo)

    return out_flat.reshape(T, B, E)


def reference_attention(query, params, num_heads):
    """Pure-JAX (f32) mirror of the PyTorch Attention.forward default path."""
    T, B, E = query.shape
    hd = E // num_heads
    scaling = float(hd) ** (-0.5)

    q = (query @ params["q_w"].T + params["q_b"]) * scaling
    k = query @ params["k_w"].T + params["k_b"]
    v = query @ params["v_w"].T + params["v_b"]

    def shape(t):  # (T, B, E) -> (B*nh, T, hd)
        return t.reshape(T, B * num_heads, hd).transpose(1, 0, 2)

    q, k, v = shape(q), shape(k), shape(v)
    w = jnp.einsum("btd,bsd->bts", q, k)
    w = jax.nn.softmax(w, axis=-1)
    a = jnp.einsum("bts,bsd->btd", w, v)
    a = a.transpose(1, 0, 2).reshape(T, B, E)
    return a @ params["o_w"].T + params["o_b"]


def init_params(key, embed_dim):
    ks = jax.random.split(key, 8)
    scale = 1.0 / jnp.sqrt(embed_dim)
    return {
        "q_w": jax.random.normal(ks[0], (embed_dim, embed_dim), jnp.float32) * scale,
        "q_b": jax.random.normal(ks[1], (embed_dim,), jnp.float32) * 0.01,
        "k_w": jax.random.normal(ks[2], (embed_dim, embed_dim), jnp.float32) * scale,
        "k_b": jax.random.normal(ks[3], (embed_dim,), jnp.float32) * 0.01,
        "v_w": jax.random.normal(ks[4], (embed_dim, embed_dim), jnp.float32) * scale,
        "v_b": jax.random.normal(ks[5], (embed_dim,), jnp.float32) * 0.01,
        "o_w": jax.random.normal(ks[6], (embed_dim, embed_dim), jnp.float32) * scale,
        "o_b": jax.random.normal(ks[7], (embed_dim,), jnp.float32) * 0.01,
    }


if __name__ == "__main__":
    # Small shapes; E=128 keeps the lane-flattened layout tile-aligned, and
    # block_q=8 < T exercises the query-tile grid axis (2 tiles per batch).
    tgt_len, bsz, embed_dim, num_heads = 16, 2, 128, 4

    key = jax.random.PRNGKey(0)
    k_params, k_x = jax.random.split(key)
    params = init_params(k_params, embed_dim)
    query = jax.random.normal(k_x, (tgt_len, bsz, embed_dim), jnp.float32)

    out = attention_forward(query, params, num_heads, block_q=8)
    out = jax.block_until_ready(out)

    ref = reference_attention(query, params, num_heads)
    assert out.shape == (tgt_len, bsz, embed_dim)
    # bf16 MXU inputs (f32 accumulation) + approx softmax reciprocal -> small
    # numerical drift vs. the all-f32 reference; logic errors would be O(1).
    assert jnp.allclose(out, ref, atol=5e-2, rtol=5e-2), "mismatch vs. reference"

    print("KERNEL_OK")
</pallas_src>

<mosaic_0001>
module attributes {stable_mosaic.version = 11 : i64} {
  func.func @_self_attention_kernel(%arg0: i32, %arg1: i32, %arg2: memref<8x128xbf16, #tpu.memory_space<vmem>>, %arg3: memref<16x128xbf16, #tpu.memory_space<vmem>>, %arg4: memref<128x128xbf16, #tpu.memory_space<vmem>>, %arg5: memref<1x128xf32, #tpu.memory_space<vmem>>, %arg6: memref<128x256xbf16, #tpu.memory_space<vmem>>, %arg7: memref<1x256xf32, #tpu.memory_space<vmem>>, %arg8: memref<128x128xbf16, #tpu.memory_space<vmem>>, %arg9: memref<1x128xf32, #tpu.memory_space<vmem>>, %arg10: memref<8x128xf32, #tpu.memory_space<vmem>>) attributes {dimension_semantics = [#tpu.dimension_semantics<parallel>, #tpu.dimension_semantics<parallel>], iteration_bounds = array<i64: 2, 2>, scalar_prefetch = 0 : i64, scratch_operands = 0 : i64, tpu.core_type = #tpu.core_type<tc>, window_params = [{transform_indices = @transform_0, window_bounds = array<i64: 8, 128>}, {transform_indices = @transform_1, window_bounds = array<i64: 16, 128>}, {pipeline_mode = #tpu.pipeline_mode<synchronous>, transform_indices = @transform_2, window_bounds = array<i64: 128, 128>}, {pipeline_mode = #tpu.pipeline_mode<synchronous>, transform_indices = @transform_3, window_bounds = array<i64: 1, 128>}, {pipeline_mode = #tpu.pipeline_mode<synchronous>, transform_indices = @transform_4, window_bounds = array<i64: 128, 256>}, {pipeline_mode = #tpu.pipeline_mode<synchronous>, transform_indices = @transform_5, window_bounds = array<i64: 1, 256>}, {pipeline_mode = #tpu.pipeline_mode<synchronous>, transform_indices = @transform_6, window_bounds = array<i64: 128, 128>}, {pipeline_mode = #tpu.pipeline_mode<synchronous>, transform_indices = @transform_7, window_bounds = array<i64: 1, 128>}, {transform_indices = @transform_8, window_bounds = array<i64: 8, 128>}]} {
    %c0 = arith.constant 0 : index
    %c0_0 = arith.constant 0 : index
    %0 = vector.load %arg2[%c0, %c0_0] : memref<8x128xbf16, #tpu.memory_space<vmem>>, vector<8x128xbf16>
    %c0_1 = arith.constant 0 : index
    %c0_2 = arith.constant 0 : index
    %1 = vector.load %arg3[%c0_1, %c0_2] : memref<16x128xbf16, #tpu.memory_space<vmem>>, vector<16x128xbf16>
    %c0_3 = arith.constant 0 : index
    %c0_4 = arith.constant 0 : index
    %2 = vector.load %arg4[%c0_3, %c0_4] : memref<128x128xbf16, #tpu.memory_space<vmem>>, vector<128x128xbf16>
    %cst = arith.constant dense<0.000000e+00> : vector<8x128xf32>
    %3 = tpu.matmul %0, %2, %cst {dimension_numbers = #tpu.dot_dimension_numbers<[1], [0], [0], [1], [0, 0, 1, 1], [], []>} : vector<8x128xbf16>, vector<128x128xbf16>, vector<8x128xf32> -> vector<8x128xf32>
    %c0_5 = arith.constant 0 : index
    %c0_6 = arith.constant 0 : index
    %4 = vector.load %arg5[%c0_5, %c0_6] : memref<1x128xf32, #tpu.memory_space<vmem>>, vector<1x128xf32>
    %5 = vector.broadcast %4 : vector<1x128xf32> to vector<8x128xf32>
    %6 = arith.addf %3, %5 : vector<8x128xf32>
    %c0_7 = arith.constant 0 : index
    %c0_8 = arith.constant 0 : index
    %7 = vector.load %arg6[%c0_7, %c0_8] : memref<128x256xbf16, #tpu.memory_space<vmem>>, vector<128x256xbf16>
    %cst_9 = arith.constant dense<0.000000e+00> : vector<16x256xf32>
    %8 = tpu.matmul %1, %7, %cst_9 {dimension_numbers = #tpu.dot_dimension_numbers<[1], [0], [0], [1], [0, 0, 1, 1], [], []>} : vector<16x128xbf16>, vector<128x256xbf16>, vector<16x256xf32> -> vector<16x256xf32>
    %c0_10 = arith.constant 0 : index
    %c0_11 = arith.constant 0 : index
    %9 = vector.load %arg7[%c0_10, %c0_11] : memref<1x256xf32, #tpu.memory_space<vmem>>, vector<1x256xf32>
    %10 = vector.broadcast %9 : vector<1x256xf32> to vector<16x256xf32>
    %11 = arith.addf %8, %10 : vector<16x256xf32>
    %12 = arith.truncf %6 : vector<8x128xf32> to vector<8x128xbf16>
    %13 = vector.extract_strided_slice %11 {offsets = [0, 0], sizes = [16, 128], strides = [1, 1]} : vector<16x256xf32> to vector<16x128xf32>
    %14 = arith.truncf %13 : vector<16x128xf32> to vector<16x128xbf16>
    %15 = vector.extract_strided_slice %11 {offsets = [0, 128], sizes = [16, 128], strides = [1, 1]} : vector<16x256xf32> to vector<16x128xf32>
    %16 = arith.truncf %15 : vector<16x128xf32> to vector<16x128xbf16>
    %17 = vector.extract_strided_slice %12 {offsets = [0, 0], sizes = [8, 32], strides = [1, 1]} : vector<8x128xbf16> to vector<8x32xbf16>
    %18 = vector.extract_strided_slice %14 {offsets = [0, 0], sizes = [16, 32], strides = [1, 1]} : vector<16x128xbf16> to vector<16x32xbf16>
    %19 = vector.extract_strided_slice %16 {offsets = [0, 0], sizes = [16, 32], strides = [1, 1]} : vector<16x128xbf16> to vector<16x32xbf16>
    %cst_12 = arith.constant dense<0.000000e+00> : vector<8x16xf32>
    %20 = tpu.matmul %17, %18, %cst_12 {dimension_numbers = #tpu.dot_dimension_numbers<[1], [1], [0], [0], [0, 0, 1, 0], [], []>} : vector<8x32xbf16>, vector<16x32xbf16>, vector<8x16xf32> -> vector<8x16xf32>
    %cst_13 = arith.constant dense<0xFF800000> : vector<8xf32>
    %21 = vector.multi_reduction <maximumf>, %20, %cst_13 [1] : vector<8x16xf32> to vector<8xf32>
    %22 = vector.shape_cast %21 : vector<8xf32> to vector<8x1xf32>
    %23 = vector.broadcast %22 : vector<8x1xf32> to vector<8x16xf32>
    %24 = arith.subf %20, %23 : vector<8x16xf32>
    %25 = math.exp %24 : vector<8x16xf32>
    %cst_14 = arith.constant dense<0.000000e+00> : vector<8xf32>
    %26 = vector.multi_reduction <add>, %25, %cst_14 [1] : vector<8x16xf32> to vector<8xf32>
    %27 = vector.shape_cast %26 : vector<8xf32> to vector<8x1xf32>
    %28 = tpu.reciprocal %27 {approx = true} : vector<8x1xf32> -> vector<8x1xf32>
    %29 = vector.broadcast %28 : vector<8x1xf32> to vector<8x16xf32>
    %30 = arith.mulf %25, %29 : vector<8x16xf32>
    %31 = arith.truncf %30 : vector<8x16xf32> to vector<8x16xbf16>
    %cst_15 = arith.constant dense<0.000000e+00> : vector<8x32xf32>
    %32 = tpu.matmul %31, %19, %cst_15 {dimension_numbers = #tpu.dot_dimension_numbers<[1], [0], [0], [1], [0, 0, 1, 1], [], []>} : vector<8x16xbf16>, vector<16x32xbf16>, vector<8x32xf32> -> vector<8x32xf32>
    %33 = vector.extract_strided_slice %12 {offsets = [0, 32], sizes = [8, 32], strides = [1, 1]} : vector<8x128xbf16> to vector<8x32xbf16>
    %34 = vector.extract_strided_slice %14 {offsets = [0, 32], sizes = [16, 32], strides = [1, 1]} : vector<16x128xbf16> to vector<16x32xbf16>
    %35 = vector.extract_strided_slice %16 {offsets = [0, 32], sizes = [16, 32], strides = [1, 1]} : vector<16x128xbf16> to vector<16x32xbf16>
    %cst_16 = arith.constant dense<0.000000e+00> : vector<8x16xf32>
    %36 = tpu.matmul %33, %34, %cst_16 {dimension_numbers = #tpu.dot_dimension_numbers<[1], [1], [0], [0], [0, 0, 1, 0], [], []>} : vector<8x32xbf16>, vector<16x32xbf16>, vector<8x16xf32> -> vector<8x16xf32>
    %cst_17 = arith.constant dense<0xFF800000> : vector<8xf32>
    %37 = vector.multi_reduction <maximumf>, %36, %cst_17 [1] : vector<8x16xf32> to vector<8xf32>
    %38 = vector.shape_cast %37 : vector<8xf32> to vector<8x1xf32>
    %39 = vector.broadcast %38 : vector<8x1xf32> to vector<8x16xf32>
    %40 = arith.subf %36, %39 : vector<8x16xf32>
    %41 = math.exp %40 : vector<8x16xf32>
    %cst_18 = arith.constant dense<0.000000e+00> : vector<8xf32>
    %42 = vector.multi_reduction <add>, %41, %cst_18 [1] : vector<8x16xf32> to vector<8xf32>
    %43 = vector.shape_cast %42 : vector<8xf32> to vector<8x1xf32>
    %44 = tpu.reciprocal %43 {approx = true} : vector<8x1xf32> -> vector<8x1xf32>
    %45 = vector.broadcast %44 : vector<8x1xf32> to vector<8x16xf32>
    %46 = arith.mulf %41, %45 : vector<8x16xf32>
    %47 = arith.truncf %46 : vector<8x16xf32> to vector<8x16xbf16>
    %cst_19 = arith.constant dense<0.000000e+00> : vector<8x32xf32>
    %48 = tpu.matmul %47, %35, %cst_19 {dimension_numbers = #tpu.dot_dimension_numbers<[1], [0], [0], [1], [0, 0, 1, 1], [], []>} : vector<8x16xbf16>, vector<16x32xbf16>, vector<8x32xf32> -> vector<8x32xf32>
    %49 = vector.extract_strided_slice %12 {offsets = [0, 64], sizes = [8, 32], strides = [1, 1]} : vector<8x128xbf16> to vector<8x32xbf16>
    %50 = vector.extract_strided_slice %14 {offsets = [0, 64], sizes = [16, 32], strides = [1, 1]} : vector<16x128xbf16> to vector<16x32xbf16>
    %51 = vector.extract_strided_slice %16 {offsets = [0, 64], sizes = [16, 32], strides = [1, 1]} : vector<16x128xbf16> to vector<16x32xbf16>
    %cst_20 = arith.constant dense<0.000000e+00> : vector<8x16xf32>
    %52 = tpu.matmul %49, %50, %cst_20 {dimension_numbers = #tpu.dot_dimension_numbers<[1], [1], [0], [0], [0, 0, 1, 0], [], []>} : vector<8x32xbf16>, vector<16x32xbf16>, vector<8x16xf32> -> vector<8x16xf32>
    %cst_21 = arith.constant dense<0xFF800000> : vector<8xf32>
    %53 = vector.multi_reduction <maximumf>, %52, %cst_21 [1] : vector<8x16xf32> to vector<8xf32>
    %54 = vector.shape_cast %53 : vector<8xf32> to vector<8x1xf32>
    %55 = vector.broadcast %54 : vector<8x1xf32> to vector<8x16xf32>
    %56 = arith.subf %52, %55 : vector<8x16xf32>
    %57 = math.exp %56 : vector<8x16xf32>
    %cst_22 = arith.constant dense<0.000000e+00> : vector<8xf32>
    %58 = vector.multi_reduction <add>, %57, %cst_22 [1] : vector<8x16xf32> to vector<8xf32>
    %59 = vector.shape_cast %58 : vector<8xf32> to vector<8x1xf32>
    %60 = tpu.reciprocal %59 {approx = true} : vector<8x1xf32> -> vector<8x1xf32>
    %61 = vector.broadcast %60 : vector<8x1xf32> to vector<8x16xf32>
    %62 = arith.mulf %57, %61 : vector<8x16xf32>
    %63 = arith.truncf %62 : vector<8x16xf32> to vector<8x16xbf16>
    %cst_23 = arith.constant dense<0.000000e+00> : vector<8x32xf32>
    %64 = tpu.matmul %63, %51, %cst_23 {dimension_numbers = #tpu.dot_dimension_numbers<[1], [0], [0], [1], [0, 0, 1, 1], [], []>} : vector<8x16xbf16>, vector<16x32xbf16>, vector<8x32xf32> -> vector<8x32xf32>
    %65 = vector.extract_strided_slice %12 {offsets = [0, 96], sizes = [8, 32], strides = [1, 1]} : vector<8x128xbf16> to vector<8x32xbf16>
    %66 = vector.extract_strided_slice %14 {offsets = [0, 96], sizes = [16, 32], strides = [1, 1]} : vector<16x128xbf16> to vector<16x32xbf16>
    %67 = vector.extract_strided_slice %16 {offsets = [0, 96], sizes = [16, 32], strides = [1, 1]} : vector<16x128xbf16> to vector<16x32xbf16>
    %cst_24 = arith.constant dense<0.000000e+00> : vector<8x16xf32>
    %68 = tpu.matmul %65, %66, %cst_24 {dimension_numbers = #tpu.dot_dimension_numbers<[1], [1], [0], [0], [0, 0, 1, 0], [], []>} : vector<8x32xbf16>, vector<16x32xbf16>, vector<8x16xf32> -> vector<8x16xf32>
    %cst_25 = arith.constant dense<0xFF800000> : vector<8xf32>
    %69 = vector.multi_reduction <maximumf>, %68, %cst_25 [1] : vector<8x16xf32> to vector<8xf32>
    %70 = vector.shape_cast %69 : vector<8xf32> to vector<8x1xf32>
    %71 = vector.broadcast %70 : vector<8x1xf32> to vector<8x16xf32>
    %72 = arith.subf %68, %71 : vector<8x16xf32>
    %73 = math.exp %72 : vector<8x16xf32>
    %cst_26 = arith.constant dense<0.000000e+00> : vector<8xf32>
    %74 = vector.multi_reduction <add>, %73, %cst_26 [1] : vector<8x16xf32> to vector<8xf32>
    %75 = vector.shape_cast %74 : vector<8xf32> to vector<8x1xf32>
    %76 = tpu.reciprocal %75 {approx = true} : vector<8x1xf32> -> vector<8x1xf32>
    %77 = vector.broadcast %76 : vector<8x1xf32> to vector<8x16xf32>
    %78 = arith.mulf %73, %77 : vector<8x16xf32>
    %79 = arith.truncf %78 : vector<8x16xf32> to vector<8x16xbf16>
    %cst_27 = arith.constant dense<0.000000e+00> : vector<8x32xf32>
    %80 = tpu.matmul %79, %67, %cst_27 {dimension_numbers = #tpu.dot_dimension_numbers<[1], [0], [0], [1], [0, 0, 1, 1], [], []>} : vector<8x16xbf16>, vector<16x32xbf16>, vector<8x32xf32> -> vector<8x32xf32>
    %81 = tpu.concatenate %32, %48, %64, %80 in 1 : vector<8x32xf32>, vector<8x32xf32>, vector<8x32xf32>, vector<8x32xf32> -> vector<8x128xf32>
    %82 = arith.truncf %81 : vector<8x128xf32> to vector<8x128xbf16>
    %c0_28 = arith.constant 0 : index
    %c0_29 = arith.constant 0 : index
    %83 = vector.load %arg8[%c0_28, %c0_29] : memref<128x128xbf16, #tpu.memory_space<vmem>>, vector<128x128xbf16>
    %cst_30 = arith.constant dense<0.000000e+00> : vector<8x128xf32>
    %84 = tpu.matmul %82, %83, %cst_30 {dimension_numbers = #tpu.dot_dimension_numbers<[1], [0], [0], [1], [0, 0, 1, 1], [], []>} : vector<8x128xbf16>, vector<128x128xbf16>, vector<8x128xf32> -> vector<8x128xf32>
    %c0_31 = arith.constant 0 : index
    %c0_32 = arith.constant 0 : index
    %85 = vector.load %arg9[%c0_31, %c0_32] : memref<1x128xf32, #tpu.memory_space<vmem>>, vector<1x128xf32>
    %86 = vector.broadcast %85 : vector<1x128xf32> to vector<8x128xf32>
    %87 = arith.addf %84, %86 : vector<8x128xf32>
    %c0_33 = arith.constant 0 : index
    %c0_34 = arith.constant 0 : index
    %88 = vector.load %arg10[%c0_33, %c0_34] : memref<8x128xf32, #tpu.memory_space<vmem>>, vector<8x128xf32>
    tpu.vector_store %arg10[%c0_33, %c0_34], %87 {strides = array<i32>} : memref<8x128xf32, #tpu.memory_space<vmem>>, vector<8x128xf32>,
    return
  }
  func.func @transform_0(%arg0: i32, %arg1: i32) -> (i32, i32) {
    %c0_i32 = arith.constant 0 : i32
    return %arg1, %arg0 : i32, i32
  }
  func.func @transform_1(%arg0: i32, %arg1: i32) -> (i32, i32) {
    %c0_i32 = arith.constant 0 : i32
    %c0_i32_0 = arith.constant 0 : i32
    return %c0_i32, %arg0 : i32, i32
  }
  func.func @transform_2(%arg0: i32, %arg1: i32) -> (i32, i32) {
    %c0_i32 = arith.constant 0 : i32
    %c0_i32_0 = arith.constant 0 : i32
    %c0_i32_1 = arith.constant 0 : i32
    return %c0_i32, %c0_i32_0 : i32, i32
  }
  func.func @transform_3(%arg0: i32, %arg1: i32) -> (i32, i32) {
    %c0_i32 = arith.constant 0 : i32
    %c0_i32_0 = arith.constant 0 : i32
    %c0_i32_1 = arith.constant 0 : i32
    return %c0_i32, %c0_i32_0 : i32, i32
  }
  func.func @transform_4(%arg0: i32, %arg1: i32) -> (i32, i32) {
    %c0_i32 = arith.constant 0 : i32
    %c0_i32_0 = arith.constant 0 : i32
    %c0_i32_1 = arith.constant 0 : i32
    return %c0_i32, %c0_i32_0 : i32, i32
  }
  func.func @transform_5(%arg0: i32, %arg1: i32) -> (i32, i32) {
    %c0_i32 = arith.constant 0 : i32
    %c0_i32_0 = arith.constant 0 : i32
    %c0_i32_1 = arith.constant 0 : i32
    return %c0_i32, %c0_i32_0 : i32, i32
  }
  func.func @transform_6(%arg0: i32, %arg1: i32) -> (i32, i32) {
    %c0_i32 = arith.constant 0 : i32
    %c0_i32_0 = arith.constant 0 : i32
    %c0_i32_1 = arith.constant 0 : i32
    return %c0_i32, %c0_i32_0 : i32, i32
  }
  func.func @transform_7(%arg0: i32, %arg1: i32) -> (i32, i32) {
    %c0_i32 = arith.constant 0 : i32
    %c0_i32_0 = arith.constant 0 : i32
    %c0_i32_1 = arith.constant 0 : i32
    return %c0_i32, %c0_i32_0 : i32, i32
  }
  func.func @transform_8(%arg0: i32, %arg1: i32) -> (i32, i32) {
    %c0_i32 = arith.constant 0 : i32
    return %arg1, %arg0 : i32, i32
  }
}

</mosaic_0001>

<llo_original>
// kernel: tpu_custom_call.1
$region0: #{tpu_custom_call.1}
  #allocation0 [shape = 'u32[]', space=smem, size = 0x4, offset = 0x4, fixed_abs, tag = 'smem constant byte address 0x4 - core index']
  #allocation1 [shape = 'u32[72,128]{1,0:T(1,128)}', space=vmem, size = 0x9000, scoped, tag = 'internal scratch']
  %s0 = inlined_call_operand.hbm [shape: bf16[16,256], index: 0, kind: input, shape index: {}]
  %s1 = inlined_call_operand.hbm [shape: bf16[16,256], index: 1, kind: input, shape index: {}]
  %s2 = inlined_call_operand.hbm [shape: bf16[128,128], index: 2, kind: input, shape index: {}]
  %s3 = inlined_call_operand.vmem [shape: f32[1,128], index: 3, kind: input, shape index: {}]
  %s4 = inlined_call_operand.hbm [shape: bf16[128,256], index: 4, kind: input, shape index: {}]
  %s5 = inlined_call_operand.vmem [shape: f32[1,256], index: 5, kind: input, shape index: {}]
  %s6 = inlined_call_operand.hbm [shape: bf16[128,128], index: 6, kind: input, shape index: {}]
  %s7 = inlined_call_operand.vmem [shape: f32[1,128], index: 7, kind: input, shape index: {}]
  %s8 = inlined_call_operand.hbm [shape: f32[16,256], index: 8, kind: output, shape index: {}]
  %s9 = sld [smem:[#allocation0]]
  $region85: #{tpu_custom_call.1} parent=0
    _
  %s11 = ssub.s32 1, %s9
  %s12 = scalar_select 0, %s11, %s9
  $region1: #{tpu_custom_call.1} parent=0
    #allocation2 [shape = 'u8[4096]{0}', space=vmem, size = 0x1000, scoped, tag = 'input window, operand 0']
    #allocation3 [shape = 's32[2]{0}', space=sflag, size = 0x8, scoped, tag = 'scoped memory for tpu_custom_call.1']
    #allocation4 [shape = 's32[2]{0}', space=sflag, size = 0x8, scoped, tag = 'scoped memory for tpu_custom_call.1']
    #allocation5 [shape = 'u8[8192]{0}', space=vmem, size = 0x2000, scoped, tag = 'input window, operand 1']
    #allocation6 [shape = 's32[2]{0}', space=sflag, size = 0x8, scoped, tag = 'scoped memory for tpu_custom_call.1']
    #allocation7 [shape = 'u8[32768]{0}', space=vmem, size = 0x8000, scoped, tag = 'input window, operand 2, single buffered']
    #allocation8 [shape = 'u8[65536]{0}', space=vmem, size = 0x10000, scoped, tag = 'input window, operand 4, single buffered']
    #allocation9 [shape = 's32[1]{0}', space=sflag, size = 0x4, scoped, tag = 'scoped memory for tpu_custom_call.1']
    #allocation10 [shape = 'u8[32768]{0}', space=vmem, size = 0x8000, scoped, tag = 'input window, operand 6, single buffered']
    #allocation11 [shape = 'u8[8192]{0}', space=vmem, size = 0x2000, scoped, tag = 'output window, operand 0']
    %13 = vsyncpa [#allocation3], 0
    %s14 = scalar_lea.sflag [#allocation3], 1
    %15 = vsyncpa %s14, 0
    %16 = vsyncpa [#allocation6], 0
    %s17 = scalar_lea.sflag [#allocation6], 1
    %18 = vsyncpa %s17, 0
    %19 = vsyncpa [#allocation9], 0
    %20 = vsyncpa [#allocation4], 0
    %s21 = scalar_lea.sflag [#allocation4], 1
    %22 = vsyncpa %s21, 0
    loop: start=0, step=1, limit=6
    $region2: #{tpu_custom_call.1} parent=1 // loop_pre_header
      _
    $region3: #{tpu_custom_call.1} parent=1 // loop_header
      %s24 = sphi 0, %s28
      %p25 = scmp.ge.s32.totalorder %s24, 6
      %s31 = sphi 0, %s43
      %s32 = sphi 0, %s39
      %s33 = sphi 0, %s31
      %s34 = sphi 0, %s32
      %s35 = sphi 0, %s33
      %s36 = sphi 0, %s34
      %s48 = sphi 0, %s50
      %s51 = sphi 0, %s48
      %s52 = sphi 0, %s51
      %s68 = sphi 0, %s52
      %s74 = sphi 0, %s76
      %s77 = sphi 0, %s74
      %s78 = sphi 0, %s77
      %s94 = sphi 0, %s78
      %s98 = sphi 0, %s98
      %s100 = sphi 0, %s98
      %s101 = sphi 0, %s100
      %s115 = sphi 0, %s101
      %s119 = sphi 0, %s119
      %s121 = sphi 0, %s119
      %s122 = sphi 0, %s121
      %s136 = sphi 0, %s122
      %s140 = sphi 0, %s140
      %s142 = sphi 0, %s140
      %s143 = sphi 0, %s142
      %s157 = sphi 0, %s143
      %s161 = sphi 0, %s161
      %s163 = sphi 0, %s161
      %s164 = sphi 0, %s163
      %s178 = sphi 0, %s164
      %s182 = sphi 0, %s182
      %s184 = sphi 0, %s182
      %s185 = sphi 0, %s184
      %s199 = sphi 0, %s185
      %s203 = sphi 0, %s203
      %s205 = sphi 0, %s203
      %s206 = sphi 0, %s205
      %s220 = sphi 0, %s206
      %s228 = sphi 0, %s230
      %s231 = sphi 0, %s228
      %s232 = sphi 0, %s231
      %s248 = sphi 0, %s232
    $region4: #{tpu_custom_call.1} parent=1 // loop_header_branch
      %27 = sbr.rel (%p25) target = $region8
    $region5: #{tpu_custom_call.1} parent=1 // loop_body
      %s29 = ssub.s32 %s24, 1
      %s30 = ssub.s32 %s24, 2
      %s37 = sadd.s32 1, %s32
      %p38 = scmp.ge.s32.totalorder %s37, 2
      %s39 = scalar_select %p38, 0, %s37
      %s40 = sadd.s32 1, %s31
      %s41 = scalar_select %p38, %s40, %s31
      %p42 = scmp.ge.s32.totalorder %s41, 2
      %s43 = scalar_select %p42, 0, %s41
      %s44 = ssub.s32 %s32, %s39
      %s45 = ssub.s32 %s31, %s43
      %s46 = sor.u32 %s44, %s45
      %p47 = scmp.eq.s32.totalorder %s46, 0
      %s49 = sadd.s32 %s48, 1
      %s50 = scalar_select %p47, %s48, %s49
      %p53 = pneg %p47
      %p54 = scmp.eq.s32.totalorder %s24, 3
      %p55 = por %p53, %p54
      %p56 = scmp.ne.s32.totalorder %s48, %s51
      %p57 = scmp.eq.s32.totalorder %s24, 0
      %p58 = por %p56, %p57
      %p59 = scmp.ne.s32.totalorder %s48, %s51
      %p60 = scmp.eq.s32.totalorder %s29, 3
      %p61 = por %p59, %p60
      %p62 = scmp.ne.s32.totalorder %s51, %s52
      %p63 = scmp.eq.s32.totalorder %s29, 0
      %p64 = por %p62, %p63
      %p65 = scmp.ne.s32.totalorder %s51, %s52
      %p66 = scmp.eq.s32.totalorder %s30, 3
      %p67 = por %p65, %p66
      %p69 = scmp.ne.s32.totalorder %s52, %s68
      %p70 = scmp.eq.s32.totalorder %s30, 0
      %p71 = por %p69, %p70
      %s72 = ssub.s32 %s31, %s43
      %p73 = scmp.eq.s32.totalorder %s72, 0
      %s75 = sadd.s32 %s74, 1
      %s76 = scalar_select %p73, %s74, %s75
      %p79 = pneg %p73
      %p80 = scmp.eq.s32.totalorder %s24, 3
      %p81 = por %p79, %p80
      %p82 = scmp.ne.s32.totalorder %s74, %s77
      %p83 = scmp.eq.s32.totalorder %s24, 0
      %p84 = por %p82, %p83
      %p85 = scmp.ne.s32.totalorder %s74, %s77
      %p86 = scmp.eq.s32.totalorder %s29, 3
      %p87 = por %p85, %p86
      %p88 = scmp.ne.s32.totalorder %s77, %s78
      %p89 = scmp.eq.s32.totalorder %s29, 0
      %p90 = por %p88, %p89
      %p91 = scmp.ne.s32.totalorder %s77, %s78
      %p92 = scmp.eq.s32.totalorder %s30, 3
      %p93 = por %p91, %p92
      %p95 = scmp.ne.s32.totalorder %s78, %s94
      %p96 = scmp.eq.s32.totalorder %s30, 0
      %p97 = por %p95, %p96
      %s99 = sadd.s32 %s98, 1
      %p102 = scmp.eq.s32.totalorder %s24, 3
      %p103 = scmp.ne.s32.totalorder %s98, %s100
      %p104 = scmp.eq.s32.totalorder %s24, 0
      %p105 = por %p103, %p104
      %p106 = scmp.ne.s32.totalorder %s98, %s100
      %p107 = scmp.eq.s32.totalorder %s29, 3
      %p108 = por %p106, %p107
      %p109 = scmp.ne.s32.totalorder %s100, %s101
      %p110 = scmp.eq.s32.totalorder %s29, 0
      %p111 = por %p109, %p110
      %p112 = scmp.ne.s32.totalorder %s100, %s101
      %p113 = scmp.eq.s32.totalorder %s30, 3
      %p114 = por %p112, %p113
      %p116 = scmp.ne.s32.totalorder %s101, %s115
      %p117 = scmp.eq.s32.totalorder %s30, 0
      %p118 = por %p116, %p117
      %s120 = sadd.s32 %s119, 1
      %p123 = scmp.eq.s32.totalorder %s24, 3
      %p124 = scmp.ne.s32.totalorder %s119, %s121
      %p125 = scmp.eq.s32.totalorder %s24, 0
      %p126 = por %p124, %p125
      %p127 = scmp.ne.s32.totalorder %s119, %s121
      %p128 = scmp.eq.s32.totalorder %s29, 3
      %p129 = por %p127, %p128
      %p130 = scmp.ne.s32.totalorder %s121, %s122
      %p131 = scmp.eq.s32.totalorder %s29, 0
      %p132 = por %p130, %p131
      %p133 = scmp.ne.s32.totalorder %s121, %s122
      %p134 = scmp.eq.s32.totalorder %s30, 3
      %p135 = por %p133, %p134
      %p137 = scmp.ne.s32.totalorder %s122, %s136
      %p138 = scmp.eq.s32.totalorder %s30, 0
      %p139 = por %p137, %p138
      %s141 = sadd.s32 %s140, 1
      %p144 = scmp.eq.s32.totalorder %s24, 3
      %p145 = scmp.ne.s32.totalorder %s140, %s142
      %p146 = scmp.eq.s32.totalorder %s24, 0
      %p147 = por %p145, %p146
      %p148 = scmp.ne.s32.totalorder %s140, %s142
      %p149 = scmp.eq.s32.totalorder %s29, 3
      %p150 = por %p148, %p149
      %p151 = scmp.ne.s32.totalorder %s142, %s143
      %p152 = scmp.eq.s32.totalorder %s29, 0
      %p153 = por %p151, %p152
      %p154 = scmp.ne.s32.totalorder %s142, %s143
      %p155 = scmp.eq.s32.totalorder %s30, 3
      %p156 = por %p154, %p155
      %p158 = scmp.ne.s32.totalorder %s143, %s157
      %p159 = scmp.eq.s32.totalorder %s30, 0
      %p160 = por %p158, %p159
      %s162 = sadd.s32 %s161, 1
      %p165 = scmp.eq.s32.totalorder %s24, 3
      %p166 = scmp.ne.s32.totalorder %s161, %s163
      %p167 = scmp.eq.s32.totalorder %s24, 0
      %p168 = por %p166, %p167
      %p169 = scmp.ne.s32.totalorder %s161, %s163
      %p170 = scmp.eq.s32.totalorder %s29, 3
      %p171 = por %p169, %p170
      %p172 = scmp.ne.s32.totalorder %s163, %s164
      %p173 = scmp.eq.s32.totalorder %s29, 0
      %p174 = por %p172, %p173
      %p175 = scmp.ne.s32.totalorder %s163, %s164
      %p176 = scmp.eq.s32.totalorder %s30, 3
      %p177 = por %p175, %p176
      %p179 = scmp.ne.s32.totalorder %s164, %s178
      %p180 = scmp.eq.s32.totalorder %s30, 0
      %p181 = por %p179, %p180
      %s183 = sadd.s32 %s182, 1
      %p186 = scmp.eq.s32.totalorder %s24, 3
      %p187 = scmp.ne.s32.totalorder %s182, %s184
      %p188 = scmp.eq.s32.totalorder %s24, 0
      %p189 = por %p187, %p188
      %p190 = scmp.ne.s32.totalorder %s182, %s184
      %p191 = scmp.eq.s32.totalorder %s29, 3
      %p192 = por %p190, %p191
      %p193 = scmp.ne.s32.totalorder %s184, %s185
      %p194 = scmp.eq.s32.totalorder %s29, 0
      %p195 = por %p193, %p194
      %p196 = scmp.ne.s32.totalorder %s184, %s185
      %p197 = scmp.eq.s32.totalorder %s30, 3
      %p198 = por %p196, %p197
      %p200 = scmp.ne.s32.totalorder %s185, %s199
      %p201 = scmp.eq.s32.totalorder %s30, 0
      %p202 = por %p200, %p201
      %s204 = sadd.s32 %s203, 1
      %p207 = scmp.eq.s32.totalorder %s24, 3
      %p208 = scmp.ne.s32.totalorder %s203, %s205
      %p209 = scmp.eq.s32.totalorder %s24, 0
      %p210 = por %p208, %p209
      %p211 = scmp.ne.s32.totalorder %s203, %s205
      %p212 = scmp.eq.s32.totalorder %s29, 3
      %p213 = por %p211, %p212
      %p214 = scmp.ne.s32.totalorder %s205, %s206
      %p215 = scmp.eq.s32.totalorder %s29, 0
      %p216 = por %p214, %p215
      %p217 = scmp.ne.s32.totalorder %s205, %s206
      %p218 = scmp.eq.s32.totalorder %s30, 3
      %p219 = por %p217, %p218
      %p221 = scmp.ne.s32.totalorder %s206, %s220
      %p222 = scmp.eq.s32.totalorder %s30, 0
      %p223 = por %p221, %p222
      %s224 = ssub.s32 %s32, %s39
      %s225 = ssub.s32 %s31, %s43
      %s226 = sor.u32 %s224, %s225
      %p227 = scmp.eq.s32.totalorder %s226, 0
      %s229 = sadd.s32 %s228, 1
      %s230 = scalar_select %p227, %s228, %s229
      %p233 = pneg %p227
      %p234 = scmp.eq.s32.totalorder %s24, 3
      %p235 = por %p233, %p234
      %p236 = scmp.ne.s32.totalorder %s228, %s231
      %p237 = scmp.eq.s32.totalorder %s24, 0
      %p238 = por %p236, %p237
      %p239 = scmp.ne.s32.totalorder %s228, %s231
      %p240 = scmp.eq.s32.totalorder %s29, 3
      %p241 = por %p239, %p240
      %p242 = scmp.ne.s32.totalorder %s231, %s232
      %p243 = scmp.eq.s32.totalorder %s29, 0
      %p244 = por %p242, %p243
      %p245 = scmp.ne.s32.totalorder %s231, %s232
      %p246 = scmp.eq.s32.totalorder %s30, 3
      %p247 = por %p245, %p246
      %p249 = scmp.ne.s32.totalorder %s232, %s248
      %p250 = scmp.eq.s32.totalorder %s30, 0
      %p251 = por %p249, %p250
      %p252 = scmp.le.s32.totalorder 1, %s24
      %p253 = scmp.lt.s32.totalorder %s24, 5
      %p254 = pnand %p252, %p253
      %p255 = pneg %p254
      // Predicated region
      $region9: #{tpu_custom_call.1} parent=5 // pred_check
        _
      $region10: #{tpu_custom_call.1} parent=5 // pred_check_branch
        %257 = sbr.rel (%p254) target = $region12
      $region11: #{tpu_custom_call.1} parent=5 // pred_region
        %s258 = ssub.s32 %s24, 1
        // Predicated region
        $region13: #{tpu_custom_call.1} parent=11 // pred_check
          %p259 = pneg %p111
        $region14: #{tpu_custom_call.1} parent=11 // pred_check_branch
          %261 = sbr.rel (%p259) target = $region16
        $region15: #{tpu_custom_call.1} parent=11 // pred_region
          %263 = vsyncadd [#allocation6], 0
          %s264 = sshll.u32 %s2, 4
          %s265 = int_to_ptr.hbm [resolvable:$true] %s264
          %s266 = sshll.u32 [#allocation7], 4
          %s267 = int_to_ptr.vmem [resolvable:$true] %s266
          %272 = dma.hbm_to_vmem [thread:$0]  %s265, 1024, %s267, [#allocation6], 64, 64, 4
        $region16: #{tpu_custom_call.1} parent=11 // pred_fallthru
          _
        // Predicated region
        $region17: #{tpu_custom_call.1} parent=11 // pred_check
          %p273 = pneg %p132
        $region18: #{tpu_custom_call.1} parent=11 // pred_check_branch
          %275 = sbr.rel (%p273) target = $region20
        $region19: #{tpu_custom_call.1} parent=11 // pred_region
          _
        $region20: #{tpu_custom_call.1} parent=11 // pred_fallthru
          _
        // Predicated region
        $region21: #{tpu_custom_call.1} parent=11 // pred_check
          %p276 = pneg %p153
        $region22: #{tpu_custom_call.1} parent=11 // pred_check_branch
          %278 = sbr.rel (%p276) target = $region24
        $region23: #{tpu_custom_call.1} parent=11 // pred_region
          %280 = vsyncadd [#allocation9], 0
          %s281 = sshll.u32 %s4, 4
          %s282 = int_to_ptr.hbm [resolvable:$true] %s281
          %s283 = sshll.u32 [#allocation8], 4
          %s284 = int_to_ptr.vmem [resolvable:$true] %s283
          %289 = dma.hbm_to_vmem [thread:$0]  %s282, 2048, %s284, [#allocation9], 128, 128, 8
        $region24: #{tpu_custom_call.1} parent=11 // pred_fallthru
          _
        // Predicated region
        $region25: #{tpu_custom_call.1} parent=11 // pred_check
          %p290 = pneg %p174
        $region26: #{tpu_custom_call.1} parent=11 // pred_check_branch
          %292 = sbr.rel (%p290) target = $region28
        $region27: #{tpu_custom_call.1} parent=11 // pred_region
          _
        $region28: #{tpu_custom_call.1} parent=11 // pred_fallthru
          _
        // Predicated region
        $region29: #{tpu_custom_call.1} parent=11 // pred_check
          %p293 = pneg %p195
        $region30: #{tpu_custom_call.1} parent=11 // pred_check_branch
          %295 = sbr.rel (%p293) target = $region32
        $region31: #{tpu_custom_call.1} parent=11 // pred_region
          %297 = vsyncadd [#allocation9], 0
          %s298 = sshll.u32 %s6, 4
          %s299 = int_to_ptr.hbm [resolvable:$true] %s298
          %s300 = sshll.u32 [#allocation10], 4
          %s301 = int_to_ptr.vmem [resolvable:$true] %s300
          %306 = dma.hbm_to_vmem [thread:$0]  %s299, 1024, %s301, [#allocation9], 64, 64, 4
        $region32: #{tpu_custom_call.1} parent=11 // pred_fallthru
          _
        // Predicated region
        $region33: #{tpu_custom_call.1} parent=11 // pred_check
          %p307 = pneg %p216
        $region34: #{tpu_custom_call.1} parent=11 // pred_check_branch
          %309 = sbr.rel (%p307) target = $region36
        $region35: #{tpu_custom_call.1} parent=11 // pred_region
          _
        $region36: #{tpu_custom_call.1} parent=11 // pred_fallthru
          _
      $region12: #{tpu_custom_call.1} parent=5 // pred_fallthru
        _
      %p310 = scmp.lt.s32.totalorder %s24, 4
      // Predicated region
      $region37: #{tpu_custom_call.1} parent=5 // pred_check
        %p311 = pneg %p310
      $region38: #{tpu_custom_call.1} parent=5 // pred_check_branch
        %313 = sbr.rel (%p311) target = $region40
      $region39: #{tpu_custom_call.1} parent=5 // pred_region
        // Predicated region
        $region41: #{tpu_custom_call.1} parent=39 // pred_check
          %p314 = pneg %p58
        $region42: #{tpu_custom_call.1} parent=39 // pred_check_branch
          %316 = sbr.rel (%p314) target = $region44
        $region43: #{tpu_custom_call.1} parent=39 // pred_region
          %s317 = sand.u32 %s48, 1
          %s318 = scalar_lea.sflag [#allocation3], %s317
          %s319 = sand.u32 %s48, 1
          %s320 = smul.addr %s319, 4
          %s321 = scalar_lea.vmem [#allocation2], %s320
          %323 = vsyncadd %s318, 0
          %s324 = smul.addr %s32, 2
          %s325 = sadd.s32 %s31, %s324
          %s326 = smul.addr %s325, 4
          %s327 = scalar_lea.hbm %s0, %s326
          %s329 = sshll.u32 %s327, 4
          %s330 = int_to_ptr.hbm [resolvable:$true] %s329
          %s331 = sshll.u32 %s321, 4
          %s332 = int_to_ptr.vmem [resolvable:$true] %s331
          %334 = dma.hbm_to_vmem [thread:$0]  %s330, 64, %s332, %s318
        $region44: #{tpu_custom_call.1} parent=39 // pred_fallthru
          _
        // Predicated region
        $region45: #{tpu_custom_call.1} parent=39 // pred_check
          %p335 = pneg %p84
        $region46: #{tpu_custom_call.1} parent=39 // pred_check_branch
          %337 = sbr.rel (%p335) target = $region48
        $region47: #{tpu_custom_call.1} parent=39 // pred_region
          %s338 = sand.u32 %s24, 1
          %s339 = scalar_lea.sflag [#allocation6], %s338
          %s340 = sand.u32 %s74, 1
          %s341 = smul.addr %s340, 8
          %s342 = scalar_lea.vmem [#allocation5], %s341
          %344 = vsyncadd %s339, 0
          %s345 = smul.addr %s31, 4
          %s346 = scalar_lea.hbm %s1, %s345
          %s347 = sshll.u32 %s346, 4
          %s348 = int_to_ptr.hbm [resolvable:$true] %s347
          %s349 = sshll.u32 %s342, 4
          %s350 = int_to_ptr.vmem [resolvable:$true] %s349
          %355 = dma.hbm_to_vmem [thread:$0]  %s348, 128, %s350, %s339, 128, 64, 4
        $region48: #{tpu_custom_call.1} parent=39 // pred_fallthru
          _
      $region40: #{tpu_custom_call.1} parent=5 // pred_fallthru
        _
      %p356 = scmp.le.s32.totalorder 1, %s24
      %p357 = scmp.lt.s32.totalorder %s24, 5
      %p358 = pnand %p356, %p357
      %p359 = pneg %p358
      // Predicated region
      $region49: #{tpu_custom_call.1} parent=5 // pred_check
        _
      $region50: #{tpu_custom_call.1} parent=5 // pred_check_branch
        %361 = sbr.rel (%p358) target = $region52
      $region51: #{tpu_custom_call.1} parent=5 // pred_region
        %s362 = ssub.s32 %s24, 1
        %s363 = sand.u32 %s51, 1
        %s364 = scalar_lea.sflag [#allocation3], %s363
        %s365 = sand.u32 %s51, 1
        %s366 = smul.addr %s365, 4
        %s367 = scalar_lea.vmem [#allocation2], %s366
        // Predicated region
        $region53: #{tpu_custom_call.1} parent=51 // pred_check
          %p368 = pneg %p64
        $region54: #{tpu_custom_call.1} parent=51 // pred_check_branch
          %370 = sbr.rel (%p368) target = $region56
        $region55: #{tpu_custom_call.1} parent=51 // pred_region
          %372 = dma.done %s364, 64
        $region56: #{tpu_custom_call.1} parent=51 // pred_fallthru
          _
        %s373 = sand.u32 %s29, 1
        %s374 = scalar_lea.sflag [#allocation6], %s373
        %s375 = sand.u32 %s77, 1
        %s376 = smul.addr %s375, 8
        %s377 = scalar_lea.vmem [#allocation5], %s376
        // Predicated region
        $region57: #{tpu_custom_call.1} parent=51 // pred_check
          %p378 = pneg %p90
        $region58: #{tpu_custom_call.1} parent=51 // pred_check_branch
          %380 = sbr.rel (%p378) target = $region60
        $region59: #{tpu_custom_call.1} parent=51 // pred_region
          %382 = dma.done %s374, 128
        $region60: #{tpu_custom_call.1} parent=51 // pred_fallthru
          _
        // Predicated region
        $region61: #{tpu_custom_call.1} parent=51 // pred_check
          %p383 = pneg %p111
        $region62: #{tpu_custom_call.1} parent=51 // pred_check_branch
          %385 = sbr.rel (%p383) target = $region64
        $region63: #{tpu_custom_call.1} parent=51 // pred_region
          %387 = dma.done [#allocation6], 1024
        $region64: #{tpu_custom_call.1} parent=51 // pred_fallthru
          _
        // Predicated region
        $region65: #{tpu_custom_call.1} parent=51 // pred_check
          %p388 = pneg %p153
        $region66: #{tpu_custom_call.1} parent=51 // pred_check_branch
          %390 = sbr.rel (%p388) target = $region68
        $region67: #{tpu_custom_call.1} parent=51 // pred_region
          %392 = dma.done [#allocation9], 2048
        $region68: #{tpu_custom_call.1} parent=51 // pred_fallthru
          _
        // Predicated region
        $region69: #{tpu_custom_call.1} parent=51 // pred_check
          %p393 = pneg %p195
        $region70: #{tpu_custom_call.1} parent=51 // pred_check_branch
          %395 = sbr.rel (%p393) target = $region72
        $region71: #{tpu_custom_call.1} parent=51 // pred_region
          %397 = dma.done [#allocation9], 1024
        $region72: #{tpu_custom_call.1} parent=51 // pred_fallthru
          _
        %s398 = sand.u32 %s51, 1
        %s399 = scalar_lea.sflag [#allocation3], %s398
        %s400 = sand.u32 %s51, 1
        %s401 = smul.addr %s400, 4
        %s402 = scalar_lea.vmem [#allocation2], %s401
        %p403 = pneg %p64
        %p404 = pneg %p61
        %s405 = sand.u32 %s29, 1
        %s406 = scalar_lea.sflag [#allocation6], %s405
        %s407 = sand.u32 %s77, 1
        %s408 = smul.addr %s407, 8
        %s409 = scalar_lea.vmem [#allocation5], %s408
        %p410 = pneg %p90
        %p411 = pneg %p87
        %p412 = pneg %p111
        %p413 = pneg %p108
        %p414 = pneg %p132
        %p415 = pneg %p129
        %p416 = pneg %p153
        %p417 = pneg %p150
        %p418 = pneg %p174
        %p419 = pneg %p171
        %p420 = pneg %p195
        %p421 = pneg %p192
        %p422 = pneg %p216
        %p423 = pneg %p213
        %p424 = pneg %p244
        %p425 = pneg %p241
        %s426 = sand.u32 %s231, 1
        %s427 = scalar_lea.sflag [#allocation4], %s426
        %s428 = sand.u32 %s231, 1
        %s429 = smul.addr %s428, 8
        %s430 = scalar_lea.vmem [#allocation11], %s429
        %v432 = vld [vmem:[%s367] sm:$0xf]
        %v433 = vld [vmem:[%s377] sm:$0xf]
        %v434 = vld [vmem:[%s377 + $0x4] sm:$0xf]
        %v435 = vld [vmem:[#allocation7] sm:$0xf]
        %v436 = vld [vmem:[#allocation7 + $0x4] sm:$0xf]
        %v437 = vld [vmem:[#allocation7 + $0x8] sm:$0xf]
        %v438 = vld [vmem:[#allocation7 + $0xc] sm:$0xf]
        %v439 = vld [vmem:[#allocation7 + $0x10] sm:$0xf]
        %v440 = vld [vmem:[#allocation7 + $0x14] sm:$0xf]
        %v441 = vld [vmem:[#allocation7 + $0x18] sm:$0xf]
        %v442 = vld [vmem:[#allocation7 + $0x1c] sm:$0xf]
        %v443 = vld [vmem:[#allocation7 + $0x20] sm:$0xf]
        %v444 = vld [vmem:[#allocation7 + $0x24] sm:$0xf]
        %v445 = vld [vmem:[#allocation7 + $0x28] sm:$0xf]
        %v446 = vld [vmem:[#allocation7 + $0x2c] sm:$0xf]
        %v447 = vld [vmem:[#allocation7 + $0x30] sm:$0xf]
        %v448 = vld [vmem:[#allocation7 + $0x34] sm:$0xf]
        %v449 = vld [vmem:[#allocation7 + $0x38] sm:$0xf]
        %v450 = vld [vmem:[#allocation7 + $0x3c] sm:$0xf]
        %v451 = vld [vmem:[%s3] sm:$0x1]
        %v453 = vperm.slane %v451, 0
        %v471 = vunpack.c.l.b16 %v435
        %v472 = vunpack.c.l.b16 %v436
        %v473 = vunpack.c.l.b16 %v437
        %v474 = vunpack.c.l.b16 %v438
        %v475 = vunpack.c.l.b16 %v439
        %v476 = vunpack.c.l.b16 %v440
        %v477 = vunpack.c.l.b16 %v441
        %v478 = vunpack.c.l.b16 %v442
        %v479 = vunpack.c.l.b16 %v443
        %v480 = vunpack.c.l.b16 %v444
        %v481 = vunpack.c.l.b16 %v445
        %v482 = vunpack.c.l.b16 %v446
        %v483 = vunpack.c.l.b16 %v447
        %v484 = vunpack.c.l.b16 %v448
        %v485 = vunpack.c.l.b16 %v449
        %v486 = vunpack.c.l.b16 %v450
        %v487 = vpack.c.b16 %v472, %v471
        %v488 = vpack.c.b16 %v474, %v473
        %v489 = vpack.c.b16 %v476, %v475
        %v490 = vpack.c.b16 %v478, %v477
        %v491 = vpack.c.b16 %v480, %v479
        %v492 = vpack.c.b16 %v482, %v481
        %v493 = vpack.c.b16 %v484, %v483
        %v494 = vpack.c.b16 %v486, %v485
        %503 = vmatpush.bf16.msra.mxu0 %v494
        %504 = vmatpush.bf16.msra.mxu0 %v493
        %505 = vmatpush.bf16.msra.mxu0 %v492
        %506 = vmatpush.bf16.msra.mxu0 %v491
        %507 = vmatpush.bf16.msra.mxu0 %v490
        %508 = vmatpush.bf16.msra.mxu0 %v489
        %509 = vmatpush.bf16.msra.mxu0 %v488
        %510 = vmatpush.bf16.msra.mxu0 %v487
        %511 = vmatmul.bf16.gmra.mxu0 %v432
        %v512 = vpop.f32.mrf.mxu0
        %v513 = vadd.f32 %v453, %v512
        %v514 = vpop.f32.mrf.mxu0
        %515 = vdwg.mxu0
        %v516 = vld [vmem:[#allocation8] sm:$0xff]
        %v517 = vld [vmem:[#allocation8 + $0x8] sm:$0xff]
        %v518 = vld [vmem:[#allocation8 + $0x10] sm:$0xff]
        %v519 = vld [vmem:[#allocation8 + $0x18] sm:$0xff]
        %v520 = vld [vmem:[#allocation8 + $0x20] sm:$0xff]
        %v521 = vld [vmem:[#allocation8 + $0x28] sm:$0xff]
        %v522 = vld [vmem:[#allocation8 + $0x30] sm:$0xff]
        %v523 = vld [vmem:[#allocation8 + $0x38] sm:$0xff]
        %v524 = vld [vmem:[#allocation8 + $0x40] sm:$0xff]
        %v525 = vld [vmem:[#allocation8 + $0x48] sm:$0xff]
        %v526 = vld [vmem:[#allocation8 + $0x50] sm:$0xff]
        %v527 = vld [vmem:[#allocation8 + $0x58] sm:$0xff]
        %v528 = vld [vmem:[#allocation8 + $0x60] sm:$0xff]
        %v529 = vld [vmem:[#allocation8 + $0x68] sm:$0xff]
        %v530 = vld [vmem:[#allocation8 + $0x70] sm:$0xff]
        %v531 = vld [vmem:[#allocation8 + $0x78] sm:$0xff]
        %v532 = vld [vmem:[%s5] sm:$0x3]
        %v534 = vperm.slane %v532, 0
        %v535 = vperm.slane %v532, 1
        %v540 = vunpack.c.l.b16 %v433
        %v541 = vunpack.c.l.b16 %v434
        %v542 = vpack.c.b16 %v541, %v540
        %v560 = vunpack.c.l.b16 %v516
        %v561 = vunpack.c.h.b16 %v516
        %v562 = vunpack.c.l.b16 %v517
        %v563 = vunpack.c.h.b16 %v517
        %v564 = vunpack.c.l.b16 %v518
        %v565 = vunpack.c.h.b16 %v518
        %v566 = vunpack.c.l.b16 %v519
        %v567 = vunpack.c.h.b16 %v519
        %v568 = vunpack.c.l.b16 %v520
        %v569 = vunpack.c.h.b16 %v520
        %v570 = vunpack.c.l.b16 %v521
        %v571 = vunpack.c.h.b16 %v521
        %v572 = vunpack.c.l.b16 %v522
        %v573 = vunpack.c.h.b16 %v522
        %v574 = vunpack.c.l.b16 %v523
        %v575 = vunpack.c.h.b16 %v523
        %v576 = vunpack.c.l.b16 %v524
        %v577 = vunpack.c.h.b16 %v524
        %v578 = vunpack.c.l.b16 %v525
        %v579 = vunpack.c.h.b16 %v525
        %v580 = vunpack.c.l.b16 %v526
        %v581 = vunpack.c.h.b16 %v526
        %v582 = vunpack.c.l.b16 %v527
        %v583 = vunpack.c.h.b16 %v527
        %v584 = vunpack.c.l.b16 %v528
        %v585 = vunpack.c.h.b16 %v528
        %v586 = vunpack.c.l.b16 %v529
        %v587 = vunpack.c.h.b16 %v529
        %v588 = vunpack.c.l.b16 %v530
        %v589 = vunpack.c.h.b16 %v530
        %v590 = vunpack.c.l.b16 %v531
        %v591 = vunpack.c.h.b16 %v531
        %v592 = vpack.c.b16 %v562, %v560
        %v593 = vpack.c.b16 %v563, %v561
        %v594 = vpack.c.b16 %v566, %v564
        %v595 = vpack.c.b16 %v567, %v565
        %v596 = vpack.c.b16 %v570, %v568
        %v597 = vpack.c.b16 %v571, %v569
        %v598 = vpack.c.b16 %v574, %v572
        %v599 = vpack.c.b16 %v575, %v573
        %v600 = vpack.c.b16 %v578, %v576
        %v601 = vpack.c.b16 %v579, %v577
        %v602 = vpack.c.b16 %v582, %v580
        %v603 = vpack.c.b16 %v583, %v581
        %v604 = vpack.c.b16 %v586, %v584
        %v605 = vpack.c.b16 %v587, %v585
        %v606 = vpack.c.b16 %v590, %v588
        %v607 = vpack.c.b16 %v591, %v589
        %624 = vmatpush.bf16.msra.mxu0 %v606
        %625 = vmatpush.bf16.msra.mxu0 %v604
        %626 = vmatpush.bf16.msra.mxu0 %v602
        %627 = vmatpush.bf16.msra.mxu0 %v600
        %628 = vmatpush.bf16.msra.mxu0 %v598
        %629 = vmatpush.bf16.msra.mxu0 %v596
        %630 = vmatpush.bf16.msra.mxu0 %v594
        %631 = vmatpush.bf16.msra.mxu0 %v592
        %632 = vmatmul.bf16.gmra.mxu0 %v542
        %v633 = vpop.f32.mrf.mxu0
        %v634 = vadd.f32 %v534, %v633
        %v635 = vpop.f32.mrf.mxu0
        %v636 = vadd.f32 %v534, %v635
        %637 = vdwg.mxu0
        %638 = vmatpush.bf16.msra.mxu0 %v607
        %639 = vmatpush.bf16.msra.mxu0 %v605
        %640 = vmatpush.bf16.msra.mxu0 %v603
        %641 = vmatpush.bf16.msra.mxu0 %v601
        %642 = vmatpush.bf16.msra.mxu0 %v599
        %643 = vmatpush.bf16.msra.mxu0 %v597
        %644 = vmatpush.bf16.msra.mxu0 %v595
        %645 = vmatpush.bf16.msra.mxu0 %v593
        %646 = vmatmul.bf16.gmra.mxu0 %v542
        %v647 = vpop.f32.mrf.mxu0
        %v648 = vadd.f32 %v535, %v647
        %v649 = vpop.f32.mrf.mxu0
        %v650 = vadd.f32 %v535, %v649
        %651 = vdwg.mxu0
        %v652 = vpack.c.bf16 %v513, %v513
        %v653 = vpack.c.bf16 %v634, %v634
        %v654 = vpack.c.bf16 %v636, %v636
        %v655 = vpack.c.bf16 %v648, %v648
        %v656 = vpack.c.bf16 %v650, %v650
        %v659 = vunpack.c.l.b16 %v653
        %v660 = vunpack.c.l.b16 %v654
        %v661 = vpack.c.b16 %v660, %v659
        %vm662 = vcmask 261120
        %v664 = vsel %vm662, %v652, 0
        %v667 = vsel %vm662, %v661, 0
        %669 = vmatpush.bf16.xpose.msra.mxu0 0
        %670 = vmatpush.bf16.xpose.msra.mxu0 0
        %671 = vmatpush.bf16.xpose.msra.mxu0 0
        %672 = vmatpush.bf16.xpose.msra.mxu0 0
        %673 = vmatpush.bf16.xpose.msra.mxu0 0
        %674 = vmatpush.bf16.xpose.msra.mxu0 0
        %675 = vmatpush.bf16.xpose.msra.mxu0 0
        %676 = vmatpush.bf16.xpose.msra.mxu0 %v667
        %677 = vmatmul.bf16.gmra.mxu0 %v664
        %v678 = vpop.f32.mrf.mxu0
        %v679 = vadd.f32 0.0, %v678
        %v680 = vpop.f32.mrf.mxu0
        %681 = vdwg.mxu0
        %vm682 = vcmask 130048
        %v683 = vsel %vm682, %v679, -inf
        %684 = vmax.xlane.f32.xlu0 %v683
        %v685 = vpop.xlane.xlu0 %684
        %v686 = vsub.f32 %v679, %v685
        %v687 = vmul.f32 %v686, 1.442695
        %v688 = vpow.pop %v687
        %v689 = vsel %vm682, %v688, 0.0
        %690 = vadd.xlane.f32.xlu0 %v689
        %v691 = vpop.xlane.xlu0 %690
        %v692 = vrcp.pop %v691
        %v693 = vmul.f32 %v688, %v692
        %v694 = vpack.c.bf16 %v693, %v693
        %v697 = vunpack.c.l.b16 %v655
        %v698 = vunpack.c.l.b16 %v656
        %v699 = vpack.c.b16 %v698, %v697
        %v702 = vsel %vm682, %v694, 0
        %704 = vmatpush.bf16.msra.mxu0 0
        %705 = vmatpush.bf16.msra.mxu0 0
        %706 = vmatpush.bf16.msra.mxu0 0
        %707 = vmatpush.bf16.msra.mxu0 0
        %708 = vmatpush.bf16.msra.mxu0 0
        %709 = vmatpush.bf16.msra.mxu0 0
        %710 = vmatpush.bf16.msra.mxu0 0
        %711 = vmatpush.bf16.msra.mxu0 %v699
        %712 = vmatmul.bf16.gmra.mxu0 %v702
        %v713 = vpop.f32.mrf.mxu0
        %v714 = vadd.f32 0.0, %v713
        %v715 = vpop.f32.mrf.mxu0
        %716 = vdwg.mxu0
        %v718 = vunpack.c.l.b16 %v652
        %v719 = vpack.c.b16 %v718, %v718
        %720 = vrot.lane.b32.xlu0 %v719, 96
        %v721 = vpop.permute.xlu0 %720
        %722 = vrot.lane.b32.xlu0 %v661, 96
        %v723 = vpop.permute.xlu0 %722
        %v725 = vsel %vm662, %v721, 0
        %v728 = vsel %vm662, %v723, 0
        %730 = vmatpush.bf16.xpose.msra.mxu0 0
        %731 = vmatpush.bf16.xpose.msra.mxu0 0
        %732 = vmatpush.bf16.xpose.msra.mxu0 0
        %733 = vmatpush.bf16.xpose.msra.mxu0 0
        %734 = vmatpush.bf16.xpose.msra.mxu0 0
        %735 = vmatpush.bf16.xpose.msra.mxu0 0
        %736 = vmatpush.bf16.xpose.msra.mxu0 0
        %737 = vmatpush.bf16.xpose.msra.mxu0 %v728
        %738 = vmatmul.bf16.gmra.mxu0 %v725
        %v739 = vpop.f32.mrf.mxu0
        %v740 = vadd.f32 0.0, %v739
        %v741 = vpop.f32.mrf.mxu0
        %742 = vdwg.mxu0
        %v743 = vsel %vm682, %v740, -inf
        %744 = vmax.xlane.f32.xlu0 %v743
        %v745 = vpop.xlane.xlu0 %744
        %v746 = vsub.f32 %v740, %v745
        %v747 = vmul.f32 %v746, 1.442695
        %v748 = vpow.pop %v747
        %v749 = vsel %vm682, %v748, 0.0
        %750 = vadd.xlane.f32.xlu0 %v749
        %v751 = vpop.xlane.xlu0 %750
        %v752 = vrcp.pop %v751
        %v753 = vmul.f32 %v748, %v752
        %v754 = vpack.c.bf16 %v753, %v753
        %755 = vrot.lane.b32.xlu0 %v699, 96
        %v756 = vpop.permute.xlu0 %755
        %v759 = vsel %vm682, %v754, 0
        %761 = vmatpush.bf16.msra.mxu0 0
        %762 = vmatpush.bf16.msra.mxu0 0
        %763 = vmatpush.bf16.msra.mxu0 0
        %764 = vmatpush.bf16.msra.mxu0 0
        %765 = vmatpush.bf16.msra.mxu0 0
        %766 = vmatpush.bf16.msra.mxu0 0
        %767 = vmatpush.bf16.msra.mxu0 0
        %768 = vmatpush.bf16.msra.mxu0 %v756
        %769 = vmatmul.bf16.gmra.mxu0 %v759
        %v770 = vpop.f32.mrf.mxu0
        %v771 = vadd.f32 0.0, %v770
        %v772 = vpop.f32.mrf.mxu0
        %773 = vdwg.mxu0
        %774 = vrot.lane.b32.xlu0 %v719, 64
        %v775 = vpop.permute.xlu0 %774
        %776 = vrot.lane.b32.xlu0 %v661, 64
        %v777 = vpop.permute.xlu0 %776
        %v779 = vsel %vm662, %v775, 0
        %v782 = vsel %vm662, %v777, 0
        %784 = vmatpush.bf16.xpose.msra.mxu0 0
        %785 = vmatpush.bf16.xpose.msra.mxu0 0
        %786 = vmatpush.bf16.xpose.msra.mxu0 0
        %787 = vmatpush.bf16.xpose.msra.mxu0 0
        %788 = vmatpush.bf16.xpose.msra.mxu0 0
        %789 = vmatpush.bf16.xpose.msra.mxu0 0
        %790 = vmatpush.bf16.xpose.msra.mxu0 0
        %791 = vmatpush.bf16.xpose.msra.mxu0 %v782
        %792 = vmatmul.bf16.gmra.mxu0 %v779
        %v793 = vpop.f32.mrf.mxu0
        %v794 = vadd.f32 0.0, %v793
        %v795 = vpop.f32.mrf.mxu0
        %796 = vdwg.mxu0
        %v797 = vsel %vm682, %v794, -inf
        %798 = vmax.xlane.f32.xlu0 %v797
        %v799 = vpop.xlane.xlu0 %798
        %v800 = vsub.f32 %v794, %v799
        %v801 = vmul.f32 %v800, 1.442695
        %v802 = vpow.pop %v801
        %v803 = vsel %vm682, %v802, 0.0
        %804 = vadd.xlane.f32.xlu0 %v803
        %v805 = vpop.xlane.xlu0 %804
        %v806 = vrcp.pop %v805
        %v807 = vmul.f32 %v802, %v806
        %v808 = vpack.c.bf16 %v807, %v807
        %809 = vrot.lane.b32.xlu0 %v699, 64
        %v810 = vpop.permute.xlu0 %809
        %v813 = vsel %vm682, %v808, 0
        %815 = vmatpush.bf16.msra.mxu0 0
        %816 = vmatpush.bf16.msra.mxu0 0
        %817 = vmatpush.bf16.msra.mxu0 0
        %818 = vmatpush.bf16.msra.mxu0 0
        %819 = vmatpush.bf16.msra.mxu0 0
        %820 = vmatpush.bf16.msra.mxu0 0
        %821 = vmatpush.bf16.msra.mxu0 0
        %822 = vmatpush.bf16.msra.mxu0 %v810
        %823 = vmatmul.bf16.gmra.mxu0 %v813
        %v824 = vpop.f32.mrf.mxu0
        %v825 = vadd.f32 0.0, %v824
        %v826 = vpop.f32.mrf.mxu0
        %827 = vdwg.mxu0
        %828 = vrot.lane.b32.xlu0 %v719, 32
        %v829 = vpop.permute.xlu0 %828
        %830 = vrot.lane.b32.xlu0 %v661, 32
        %v831 = vpop.permute.xlu0 %830
        %v833 = vsel %vm662, %v829, 0
        %v836 = vsel %vm662, %v831, 0
        %838 = vmatpush.bf16.xpose.msra.mxu0 0
        %839 = vmatpush.bf16.xpose.msra.mxu0 0
        %840 = vmatpush.bf16.xpose.msra.mxu0 0
        %841 = vmatpush.bf16.xpose.msra.mxu0 0
        %842 = vmatpush.bf16.xpose.msra.mxu0 0
        %843 = vmatpush.bf16.xpose.msra.mxu0 0
        %844 = vmatpush.bf16.xpose.msra.mxu0 0
        %845 = vmatpush.bf16.xpose.msra.mxu0 %v836
        %846 = vmatmul.bf16.gmra.mxu0 %v833
        %v847 = vpop.f32.mrf.mxu0
        %v848 = vadd.f32 0.0, %v847
        %v849 = vpop.f32.mrf.mxu0
        %850 = vdwg.mxu0
        %v851 = vsel %vm682, %v848, -inf
        %852 = vmax.xlane.f32.xlu0 %v851
        %v853 = vpop.xlane.xlu0 %852
        %v854 = vsub.f32 %v848, %v853
        %v855 = vmul.f32 %v854, 1.442695
        %v856 = vpow.pop %v855
        %v857 = vsel %vm682, %v856, 0.0
        %858 = vadd.xlane.f32.xlu0 %v857
        %v859 = vpop.xlane.xlu0 %858
        %v860 = vrcp.pop %v859
        %v861 = vmul.f32 %v856, %v860
        %v862 = vpack.c.bf16 %v861, %v861
        %863 = vrot.lane.b32.xlu0 %v699, 32
        %v864 = vpop.permute.xlu0 %863
        %v867 = vsel %vm682, %v862, 0
        %869 = vmatpush.bf16.msra.mxu0 0
        %870 = vmatpush.bf16.msra.mxu0 0
        %871 = vmatpush.bf16.msra.mxu0 0
        %872 = vmatpush.bf16.msra.mxu0 0
        %873 = vmatpush.bf16.msra.mxu0 0
        %874 = vmatpush.bf16.msra.mxu0 0
        %875 = vmatpush.bf16.msra.mxu0 0
        %876 = vmatpush.bf16.msra.mxu0 %v864
        %877 = vmatmul.bf16.gmra.mxu0 %v867
        %v878 = vpop.f32.mrf.mxu0
        %v879 = vadd.f32 0.0, %v878
        %v880 = vpop.f32.mrf.mxu0
        %881 = vdwg.mxu0
        %883 = vrot.lane.b32.xlu0 %v771, 32
        %v884 = vpop.permute.xlu0 %883
        %887 = vrot.lane.b32.xlu0 %v825, 64
        %v888 = vpop.permute.xlu0 %887
        %891 = vrot.lane.b32.xlu0 %v879, 96
        %v892 = vpop.permute.xlu0 %891
        %v894 = vsel %vm662, %v714, %v884
        %vm895 = vcmask 523264
        %v896 = vsel %vm895, %v894, %v888
        %vm897 = vcmask 785408
        %v898 = vsel %vm897, %v896, %v892
        %v899 = vpack.c.bf16 %v898, %v898
        %v900 = vld [vmem:[#allocation10] sm:$0xf]
        %v901 = vld [vmem:[#allocation10 + $0x4] sm:$0xf]
        %v902 = vld [vmem:[#allocation10 + $0x8] sm:$0xf]
        %v903 = vld [vmem:[#allocation10 + $0xc] sm:$0xf]
        %v904 = vld [vmem:[#allocation10 + $0x10] sm:$0xf]
        %v905 = vld [vmem:[#allocation10 + $0x14] sm:$0xf]
        %v906 = vld [vmem:[#allocation10 + $0x18] sm:$0xf]
        %v907 = vld [vmem:[#allocation10 + $0x1c] sm:$0xf]
        %v908 = vld [vmem:[#allocation10 + $0x20] sm:$0xf]
        %v909 = vld [vmem:[#allocation10 + $0x24] sm:$0xf]
        %v910 = vld [vmem:[#allocation10 + $0x28] sm:$0xf]
        %v911 = vld [vmem:[#allocation10 + $0x2c] sm:$0xf]
        %v912 = vld [vmem:[#allocation10 + $0x30] sm:$0xf]
        %v913 = vld [vmem:[#allocation10 + $0x34] sm:$0xf]
        %v914 = vld [vmem:[#allocation10 + $0x38] sm:$0xf]
        %v915 = vld [vmem:[#allocation10 + $0x3c] sm:$0xf]
        %v916 = vld [vmem:[%s7] sm:$0x1]
        %v918 = vperm.slane %v916, 0
        %v936 = vunpack.c.l.b16 %v900
        %v937 = vunpack.c.l.b16 %v901
        %v938 = vunpack.c.l.b16 %v902
        %v939 = vunpack.c.l.b16 %v903
        %v940 = vunpack.c.l.b16 %v904
        %v941 = vunpack.c.l.b16 %v905
        %v942 = vunpack.c.l.b16 %v906
        %v943 = vunpack.c.l.b16 %v907
        %v944 = vunpack.c.l.b16 %v908
        %v945 = vunpack.c.l.b16 %v909
        %v946 = vunpack.c.l.b16 %v910
        %v947 = vunpack.c.l.b16 %v911
        %v948 = vunpack.c.l.b16 %v912
        %v949 = vunpack.c.l.b16 %v913
        %v950 = vunpack.c.l.b16 %v914
        %v951 = vunpack.c.l.b16 %v915
        %v952 = vpack.c.b16 %v937, %v936
        %v953 = vpack.c.b16 %v939, %v938
        %v954 = vpack.c.b16 %v941, %v940
        %v955 = vpack.c.b16 %v943, %v942
        %v956 = vpack.c.b16 %v945, %v944
        %v957 = vpack.c.b16 %v947, %v946
        %v958 = vpack.c.b16 %v949, %v948
        %v959 = vpack.c.b16 %v951, %v950
        %968 = vmatpush.bf16.msra.mxu0 %v959
        %969 = vmatpush.bf16.msra.mxu0 %v958
        %970 = vmatpush.bf16.msra.mxu0 %v957
        %971 = vmatpush.bf16.msra.mxu0 %v956
        %972 = vmatpush.bf16.msra.mxu0 %v955
        %973 = vmatpush.bf16.msra.mxu0 %v954
        %974 = vmatpush.bf16.msra.mxu0 %v953
        %975 = vmatpush.bf16.msra.mxu0 %v952
        %976 = vmatmul.bf16.gmra.mxu0 %v899
        %v977 = vpop.f32.mrf.mxu0
        %v978 = vadd.f32 %v918, %v977
        %v979 = vpop.f32.mrf.mxu0
        %980 = vdwg.mxu0
        %981 = vst [vmem:[%s430] sm:$0xff] %v978
        %s982 = sand.u32 %s231, 1
        %s983 = scalar_lea.sflag [#allocation4], %s982
        %s984 = sand.u32 %s231, 1
        %s985 = smul.addr %s984, 8
        %s986 = scalar_lea.vmem [#allocation11], %s985
        // Predicated region
        $region73: #{tpu_custom_call.1} parent=51 // pred_check
          %p987 = pneg %p241
        $region74: #{tpu_custom_call.1} parent=51 // pred_check_branch
          %989 = sbr.rel (%p987) target = $region76
        $region75: #{tpu_custom_call.1} parent=51 // pred_region
          %991 = vsyncadd %s983, 0
          %s992 = smul.addr %s34, 2
          %s993 = sadd.s32 %s33, %s992
          %s994 = smul.addr %s993, 8
          %s995 = scalar_lea.hbm %s8, %s994
          %s997 = sshll.u32 %s986, 4
          %s998 = int_to_ptr.vmem [resolvable:$true] %s997
          %s999 = sshll.u32 %s995, 4
          %s1000 = int_to_ptr.hbm [resolvable:$true] %s999
          %1002 = dma.vmem_to_hbm [thread:$0]  %s998, 128, %s1000, %s983
        $region76: #{tpu_custom_call.1} parent=51 // pred_fallthru
          _
      $region52: #{tpu_custom_call.1} parent=5 // pred_fallthru
        _
      %p1003 = scmp.le.s32.totalorder 2, %s24
      // Predicated region
      $region77: #{tpu_custom_call.1} parent=5 // pred_check
        %p1004 = pneg %p1003
      $region78: #{tpu_custom_call.1} parent=5 // pred_check_branch
        %1006 = sbr.rel (%p1004) target = $region80
      $region79: #{tpu_custom_call.1} parent=5 // pred_region
        %s1007 = ssub.s32 %s24, 2
        // Predicated region
        $region81: #{tpu_custom_call.1} parent=79 // pred_check
          %p1008 = pneg %p247
        $region82: #{tpu_custom_call.1} parent=79 // pred_check_branch
          %1010 = sbr.rel (%p1008) target = $region84
        $region83: #{tpu_custom_call.1} parent=79 // pred_region
          %s1011 = sand.u32 %s232, 1
          %s1012 = scalar_lea.sflag [#allocation4], %s1011
          %s1013 = sand.u32 %s232, 1
          %s1014 = smul.addr %s1013, 8
          %s1015 = scalar_lea.vmem [#allocation11], %s1014
          %1017 = dma.done %s1012, 128
        $region84: #{tpu_custom_call.1} parent=79 // pred_fallthru
          _
      $region80: #{tpu_custom_call.1} parent=5 // pred_fallthru
        _
    $region6: #{tpu_custom_call.1} parent=1 // loop_footer
      %s28 = sadd.s32 1, %s24
    $region7: #{tpu_custom_call.1} parent=1 // loop_footer_branch
      %23 = sbr.rel target = $region3
    $region8: #{tpu_custom_call.1} parent=1 // loop_exit
      _
    %1018 = vsyncpa [#allocation3], 1
    %s1019 = scalar_lea.sflag [#allocation3], 1
    %1020 = vsyncpa %s1019, 1
    %1021 = vsyncpa [#allocation6], 1
    %s1022 = scalar_lea.sflag [#allocation6], 1
    %1023 = vsyncpa %s1022, 1
    %1024 = vsyncpa [#allocation9], 1
    %1025 = vsyncpa [#allocation4], 1
    %s1026 = scalar_lea.sflag [#allocation4], 1
    %1027 = vsyncpa %s1026, 1

</llo_original>
